<compile_context>
chip_gen: v5e
topology: v5e:2x2
jax: 0.10.0
libtpu: 0.0.40
codegen_flags: <defaults>
</compile_context>

<pallas_src>
import math
import jax
import jax.numpy as jnp
from jax.experimental import pallas as pl
from jax.experimental.pallas import tpu as pltpu


def _round_up(n, m):
    return ((n + m - 1) // m) * m


def _physical_vmem_bytes():
    try:
        return int(pltpu.get_tpu_info().vmem_capacity_bytes)
    except Exception:
        return 64 * 1024 * 1024            # v7x per-core VMEM (most conservative)


def _vmem_plan(P, Kg, CoG, out_bytes):
    """Pick a lane-aligned P tile so that ALL double-buffered blocks
    (bf16 cols + bf16 weight + out) fit a conservative slice of the chip's
    physical VMEM, and derive an explicit scoped-VMEM limit with headroom for
    Mosaic-internal scratch (e.g. the transposed-operand relayout)."""
    phys = _physical_vmem_bytes()
    budget = min(phys // 6, 16 * 1024 * 1024)
    w_fp = 2 * CoG * Kg * 2                              # 2x bf16 weight block
    tile = min(1024, _round_up(max(P, 1), 128))
    while tile > 128 and w_fp + 2 * tile * (2 * Kg + out_bytes * CoG) > budget:
        tile -= 128
    fp = w_fp + 2 * tile * (2 * Kg + out_bytes * CoG)
    vmem_limit = int(min(max(4 * fp, 32 * 1024 * 1024), phys * 3 // 4))
    return tile, vmem_limit


# --------------------------------------------------------------------------
# Pallas kernel: (CoG x Kg) contracted with (p_tile x Kg) on the MXU.
# bf16 operands, f32 accumulation, out_dtype (default bf16) store.
# --------------------------------------------------------------------------

def _deform_matmul_kernel(w_ref, cols_ref, out_ref):
    # w_ref:    (1, CoG, Kg)         bf16
    # cols_ref: (1, 1, p_tile, Kg)   bf16
    # out_ref:  (1, 1, CoG, p_tile)  out_dtype
    w = w_ref[0]                     # (CoG, Kg)
    c = cols_ref[0, 0]               # (p_tile, Kg)
    acc = jax.lax.dot_general(       # contract both last (Kg) dims -> (CoG, p_tile)
        w, c, (((1,), (1,)), ((), ())),
        preferred_element_type=jnp.float32)
    out_ref[0, 0] = acc.astype(out_ref.dtype)


def pallas_deform_matmul(w_g, cols_g, out_dtype):
    """w_g: (G, CoG, Kg) bf16;  cols_g: (B, G, P, Kg) bf16  ->  (B, G, CoG, P)."""
    B, G, P, Kg = cols_g.shape
    CoG = w_g.shape[1]
    p_tile, vmem_limit = _vmem_plan(P, Kg, CoG, jnp.dtype(out_dtype).itemsize)
    n_pt = pl.cdiv(P, p_tile)        # ragged last tile: no padding copy of cols
    return pl.pallas_call(
        _deform_matmul_kernel,
        out_shape=jax.ShapeDtypeStruct((B, G, CoG, P), out_dtype),
        grid=(G, B, n_pt),           # weight block constant over the inner (B, nP) loop
        in_specs=[
            pl.BlockSpec((1, CoG, Kg), lambda g, b, p: (g, 0, 0)),
            pl.BlockSpec((1, 1, p_tile, Kg), lambda g, b, p: (b, g, p, 0)),
        ],
        out_specs=pl.BlockSpec((1, 1, CoG, p_tile), lambda g, b, p: (b, g, 0, p)),
        compiler_params=pltpu.CompilerParams(
            dimension_semantics=("parallel", "parallel", "parallel"),
            vmem_limit_bytes=vmem_limit),
    )(w_g, cols_g)


# --------------------------------------------------------------------------
# JAX glue: deformable bilinear sampling (DCN v1 semantics), channels-last gather,
# 4-corner combine fused, output layout (B, G, P, Kg) ready for the kernel.
# --------------------------------------------------------------------------

def deform_sampling_cols(x, offsets, kh, kw, stride, padding, dilation, groups, dg):
    """Returns cols (B, G, P, Kg) bf16 (contraction order: kernel-tap major,
    group-local channel minor) plus (Ho, Wo)."""
    B, C, H, W = x.shape
    sh, sw = stride
    ph, pw = padding
    dh, dw = dilation
    _, _, Ho, Wo = offsets.shape
    K = kh * kw
    P = Ho * Wo
    G = groups
    cpg_dg = C // dg                 # channels per deformable group
    cpg = C // G                     # channels per conv group
    Kg = cpg * K

    # offsets: (B, dg*K*2, Ho, Wo), per-tap (dy, dx) pairs -> (B, dg, Ho, Wo, K)
    off = offsets.reshape(B, dg, K, 2, Ho, Wo).astype(jnp.float32)
    dy = jnp.transpose(off[:, :, :, 0], (0, 1, 3, 4, 2))
    dx = jnp.transpose(off[:, :, :, 1], (0, 1, 3, 4, 2))

    ky = (jnp.arange(K, dtype=jnp.float32) // kw) * dh           # (K,)
    kx = (jnp.arange(K, dtype=jnp.float32) % kw) * dw
    h0 = jnp.arange(Ho, dtype=jnp.float32) * sh - ph             # (Ho,)
    w0 = jnp.arange(Wo, dtype=jnp.float32) * sw - pw             # (Wo,)
    h = h0[None, None, :, None, None] + ky[None, None, None, None, :] + dy
    w = w0[None, None, None, :, None] + kx[None, None, None, None, :] + dx
    # h, w: (B, dg, Ho, Wo, K) sampling positions

    valid = (h > -1.0) & (w > -1.0) & (h < H) & (w < W)
    h_low = jnp.floor(h)
    w_low = jnp.floor(w)
    lh = h - h_low
    lw = w - w_low
    hh = 1.0 - lh
    hw_ = 1.0 - lw
    hl = h_low.astype(jnp.int32)
    wl = w_low.astype(jnp.int32)
    hhi = hl + 1
    whi = wl + 1

    # Channels-last per deformable group: each gathered index pulls a contiguous
    # cpg_dg vector; index tensor stays (B, dg, P*K, 1) int32 (no channel broadcast).
    x_cl = jnp.transpose(x.reshape(B, dg, cpg_dg, H * W), (0, 1, 3, 2))

    acc = None
    for hi, wi, wt in ((hl, wl, hh * hw_), (hl, whi, hh * lw),
                       (hhi, wl, lh * hw_), (hhi, whi, lh * lw)):
        inb = (hi >= 0) & (hi < H) & (wi >= 0) & (wi < W)
        wt_m = jnp.where(valid & inb, wt, 0.0)                   # (B, dg, Ho, Wo, K)
        idx = jnp.clip(hi, 0, H - 1) * W + jnp.clip(wi, 0, W - 1)
        idx = idx.reshape(B, dg, P * K, 1)
        vals = jnp.take_along_axis(x_cl, idx, axis=2)            # (B, dg, P*K, cpg_dg)
        term = vals * wt_m.reshape(B, dg, P * K, 1)
        acc = term if acc is None else acc + term                # XLA fuses the combine

    cols = acc.astype(jnp.bfloat16).reshape(B, dg, P, K, cpg_dg)

    # Re-split the channel axis by conv group, contraction order (k, local-ci).
    if G % dg == 0:                  # each deformable group spans G//dg conv groups
        r = G // dg                  # (free reshape when r == 1, i.e. dg == G)
        cols = cols.reshape(B, dg, P, K, r, cpg)
        cols = jnp.transpose(cols, (0, 1, 4, 2, 3, 5))
    elif dg % G == 0:                # each conv group spans dg//G deformable groups
        r = dg // G
        cols = cols.reshape(B, G, r, P, K, cpg_dg)
        cols = jnp.transpose(cols, (0, 1, 3, 4, 2, 5))
    else:                            # rare mismatched case: channel-major fallback
        cols = jnp.moveaxis(cols, -1, 2).reshape(B, G, cpg, P, K)
        cols = jnp.transpose(cols, (0, 1, 3, 4, 2))
    return cols.reshape(B, G, P, Kg), Ho, Wo


# --------------------------------------------------------------------------
# DeformConvPack forward
# --------------------------------------------------------------------------

def make_deform_conv_pack_params(key, in_channels, out_channels, kernel_size,
                                 groups=1, deformable_groups=1):
    kh, kw = kernel_size
    n = in_channels * kh * kw
    stdv = 1.0 / math.sqrt(n)
    weight = jax.random.uniform(key, (out_channels, in_channels // groups, kh, kw),
                                minval=-stdv, maxval=stdv, dtype=jnp.float32)
    coff = deformable_groups * 2 * kh * kw
    # init_offset(): conv_offset weight & bias zero-initialized
    offset_weight = jnp.zeros((coff, in_channels, kh, kw), jnp.float32)
    offset_bias = jnp.zeros((coff,), jnp.float32)
    return {"weight": weight, "offset_weight": offset_weight, "offset_bias": offset_bias}


def deform_conv_pack_forward(x, params, kernel_size, stride, padding, dilation,
                             groups, deformable_groups, out_dtype=jnp.bfloat16):
    """DeformConvPack.forward.  out_dtype=bf16 halves kernel writeback (accumulation
    is f32 on the MXU either way); pass jnp.float32 for strict dtype parity with
    the PyTorch module."""
    kh, kw = kernel_size
    B, C, H, W = x.shape
    Cout = params["weight"].shape[0]
    G = groups
    CoG = Cout // G
    K = kh * kw
    Kg = (C // G) * K

    # conv_offset (plain Conv2d; this module builds it without dilation).
    offsets = jax.lax.conv_general_dilated(
        x, params["offset_weight"], window_strides=stride,
        padding=[(padding[0], padding[0]), (padding[1], padding[1])],
        dimension_numbers=("NCHW", "OIHW", "NCHW"))
    offsets = offsets + params["offset_bias"][None, :, None, None]

    # Bilinear sampling + corner combine (channels-last gather stays in XLA).
    cols, Ho, Wo = deform_sampling_cols(
        x, offsets, kh, kw, stride, padding, dilation, G, deformable_groups)

    # weight -> (G, CoG, Kg) bf16, contraction order (k major, group-local ci minor)
    w_g = params["weight"].reshape(G, CoG, C // G, K)
    w_g = jnp.transpose(w_g, (0, 1, 3, 2)).reshape(G, CoG, Kg).astype(jnp.bfloat16)

    out = pallas_deform_matmul(w_g, cols, out_dtype)     # (B, G, CoG, P)
    return out.reshape(B, Cout, Ho, Wo)                  # metadata-only reshape


# --------------------------------------------------------------------------
if __name__ == "__main__":
    key = jax.random.PRNGKey(0)
    kx, kw_ = jax.random.split(key)

    # Small DeformConvPack: in=4, out=4, k=3, stride=1, pad=1, dil=1, groups=1, dg=1
    B, Cin, H, W = 2, 4, 16, 16
    Cout = 4
    kernel_size = (3, 3)
    stride = (1, 1)
    padding = (1, 1)
    dilation = (1, 1)
    groups = 1
    deformable_groups = 1

    x = jax.random.normal(kx, (B, Cin, H, W), dtype=jnp.float32)
    params = make_deform_conv_pack_params(
        kw_, Cin, Cout, kernel_size, groups, deformable_groups)

    fwd = jax.jit(lambda xx: deform_conv_pack_forward(
        xx, params, kernel_size, stride, padding, dilation,
        groups, deformable_groups))

    out = fwd(x)
    jax.block_until_ready(out)
    assert out.shape == (B, Cout, H, W), out.shape

    # Sanity check: conv_offset is zero-initialized, so offsets are zero and the
    # deformable conv must equal a plain conv with the same weight.  Reference uses
    # bf16 operands + f32 accumulation and is rounded to bf16 to match the kernel's
    # MXU precision and (bf16) output dtype.
    ref = jax.lax.conv_general_dilated(
        x.astype(jnp.bfloat16), params["weight"].astype(jnp.bfloat16),
        window_strides=stride,
        padding=[(padding[0], padding[0]), (padding[1], padding[1])],
        rhs_dilation=dilation,
        dimension_numbers=("NCHW", "OIHW", "NCHW"),
        feature_group_count=groups,
        preferred_element_type=jnp.float32).astype(jnp.bfloat16)
    out_f32 = out.astype(jnp.float32)
    ref_f32 = ref.astype(jnp.float32)
    assert jnp.allclose(out_f32, ref_f32, rtol=1e-2, atol=1e-2), \
        float(jnp.max(jnp.abs(out_f32 - ref_f32)))

    print("KERNEL_OK")
</pallas_src>

<mosaic_0001>
module attributes {stable_mosaic.version = 11 : i64} {
  func.func @_deform_matmul_kernel(%arg0: i32, %arg1: i32, %arg2: i32, %arg3: memref<1x4x36xbf16, #tpu.memory_space<vmem>>, %arg4: memref<1x1x256x36xbf16, #tpu.memory_space<vmem>>, %arg5: memref<1x1x4x256xbf16, #tpu.memory_space<vmem>>) attributes {dimension_semantics = [#tpu.dimension_semantics<parallel>, #tpu.dimension_semantics<parallel>, #tpu.dimension_semantics<parallel>], iteration_bounds = array<i64: 1, 2, 1>, scalar_prefetch = 0 : i64, scratch_operands = 0 : i64, tpu.core_type = #tpu.core_type<tc>, window_params = [{transform_indices = @transform_0, window_bounds = array<i64: 1, 4, 36>}, {transform_indices = @transform_1, window_bounds = array<i64: 1, 1, 256, 36>}, {transform_indices = @transform_2, window_bounds = array<i64: 1, 1, 4, 256>}]} {
    %c0 = arith.constant 0 : index
    %c0_0 = arith.constant 0 : index
    %c0_1 = arith.constant 0 : index
    %0 = vector.load %arg3[%c0, %c0_0, %c0_1] : memref<1x4x36xbf16, #tpu.memory_space<vmem>>, vector<1x4x36xbf16>
    %1 = vector.shape_cast %0 : vector<1x4x36xbf16> to vector<4x36xbf16>
    %c0_2 = arith.constant 0 : index
    %c0_3 = arith.constant 0 : index
    %c0_4 = arith.constant 0 : index
    %c0_5 = arith.constant 0 : index
    %2 = vector.load %arg4[%c0_2, %c0_3, %c0_4, %c0_5] : memref<1x1x256x36xbf16, #tpu.memory_space<vmem>>, vector<1x1x256x36xbf16>
    %3 = vector.shape_cast %2 : vector<1x1x256x36xbf16> to vector<256x36xbf16>
    %cst = arith.constant dense<0.000000e+00> : vector<4x256xf32>
    %4 = tpu.matmul %1, %3, %cst {dimension_numbers = #tpu.dot_dimension_numbers<[1], [1], [0], [0], [0, 0, 1, 0], [], []>} : vector<4x36xbf16>, vector<256x36xbf16>, vector<4x256xf32> -> vector<4x256xf32>
    %5 = arith.truncf %4 : vector<4x256xf32> to vector<4x256xbf16>
    %c0_6 = arith.constant 0 : index
    %c0_7 = arith.constant 0 : index
    %c0_8 = arith.constant 0 : index
    %c0_9 = arith.constant 0 : index
    %6 = vector.load %arg5[%c0_6, %c0_7, %c0_8, %c0_9] : memref<1x1x4x256xbf16, #tpu.memory_space<vmem>>, vector<1x1x4x256xbf16>
    %7 = vector.shape_cast %6 : vector<1x1x4x256xbf16> to vector<4x256xbf16>
    %8 = vector.shape_cast %5 : vector<4x256xbf16> to vector<1x1x4x256xbf16>
    tpu.vector_store %arg5[%c0_6, %c0_7, %c0_8, %c0_9], %8 {strides = array<i32>} : memref<1x1x4x256xbf16, #tpu.memory_space<vmem>>, vector<1x1x4x256xbf16>,
    return
  }
  func.func @transform_0(%arg0: i32, %arg1: i32, %arg2: i32) -> (i32, i32, i32) {
    %c0_i32 = arith.constant 0 : i32
    %c0_i32_0 = arith.constant 0 : i32
    %c0_i32_1 = arith.constant 0 : i32
    return %arg0, %c0_i32, %c0_i32_0 : i32, i32, i32
  }
  func.func @transform_1(%arg0: i32, %arg1: i32, %arg2: i32) -> (i32, i32, i32, i32) {
    %c0_i32 = arith.constant 0 : i32
    %c0_i32_0 = arith.constant 0 : i32
    return %arg1, %arg0, %arg2, %c0_i32 : i32, i32, i32, i32
  }
  func.func @transform_2(%arg0: i32, %arg1: i32, %arg2: i32) -> (i32, i32, i32, i32) {
    %c0_i32 = arith.constant 0 : i32
    %c0_i32_0 = arith.constant 0 : i32
    return %arg1, %arg0, %c0_i32, %arg2 : i32, i32, i32, i32
  }
}

</mosaic_0001>

<llo_original>
// kernel: _lambda_.1
$region0: #{_lambda_.1}
  #allocation0 [shape = 'u32[]', space=smem, size = 0x4, offset = 0x4, fixed_abs, tag = 'smem constant byte address 0x4 - core index']
  #allocation1 [shape = 'u32[72,128]{1,0:T(1,128)}', space=vmem, size = 0x9000, scoped, tag = 'internal scratch']
  %s0 = inlined_call_operand.vmem [shape: bf16[1,4,36], index: 0, kind: input, shape index: {}]
  %s1 = inlined_call_operand.vmem [shape: bf16[2,1,256,36], index: 1, kind: input, shape index: {}]
  %s2 = inlined_call_operand.vmem [shape: bf16[2,1,4,256], index: 2, kind: output, shape index: {}]
  %s3 = sld [smem:[#allocation0]]
  $region41: #{_lambda_.1} parent=0
    _
  %s5 = ssub.s32 1, %s3
  %s6 = scalar_select 0, %s5, %s3
  loop: start=0, step=1, limit=4
  $region2: #{_lambda_.1} parent=0 // loop_pre_header
    _
  $region3: #{_lambda_.1} parent=0 // loop_header
    %s8 = sphi 0, %s12
    %p9 = scmp.ge.s32.totalorder %s8, 4
    %s15 = sphi 0, %s34
    %s16 = sphi 0, %s30
    %s17 = sphi 0, %s26
    %s18 = sphi 0, %s15
    %s19 = sphi 0, %s16
    %s20 = sphi 0, %s17
    %s21 = sphi 0, %s18
    %s22 = sphi 0, %s19
    %s23 = sphi 0, %s20
    %s37 = sphi 0, %s39
    %s40 = sphi 0, %s37
    %s41 = sphi 0, %s40
    %s57 = sphi 0, %s41
    %s67 = sphi 0, %s69
    %s70 = sphi 0, %s67
    %s71 = sphi 0, %s70
    %s87 = sphi 0, %s71
    %s97 = sphi 0, %s99
    %s100 = sphi 0, %s97
    %s101 = sphi 0, %s100
    %s117 = sphi 0, %s101
  $region4: #{_lambda_.1} parent=0 // loop_header_branch
    %11 = sbr.rel (%p9) target = $region8
  $region5: #{_lambda_.1} parent=0 // loop_body
    %s13 = ssub.s32 %s8, 1
    %s14 = ssub.s32 %s8, 2
    %s24 = sadd.s32 1, %s17
    %p25 = scmp.ge.s32.totalorder %s24, 1
    %s26 = scalar_select %p25, 0, %s24
    %s27 = sadd.s32 1, %s16
    %s28 = scalar_select %p25, %s27, %s16
    %p29 = scmp.ge.s32.totalorder %s28, 2
    %s30 = scalar_select %p29, 0, %s28
    %s31 = sadd.s32 1, %s15
    %s32 = scalar_select %p29, %s31, %s15
    %p33 = scmp.ge.s32.totalorder %s32, 1
    %s34 = scalar_select %p33, 0, %s32
    %s35 = ssub.s32 %s15, %s34
    %p36 = scmp.eq.s32.totalorder %s35, 0
    %s38 = sadd.s32 %s37, 1
    %s39 = scalar_select %p36, %s37, %s38
    %p42 = pneg %p36
    %p43 = scmp.eq.s32.totalorder %s8, 1
    %p44 = por %p42, %p43
    %p45 = scmp.ne.s32.totalorder %s37, %s40
    %p46 = scmp.eq.s32.totalorder %s8, 0
    %p47 = por %p45, %p46
    %p48 = scmp.ne.s32.totalorder %s37, %s40
    %p49 = scmp.eq.s32.totalorder %s13, 1
    %p50 = por %p48, %p49
    %p51 = scmp.ne.s32.totalorder %s40, %s41
    %p52 = scmp.eq.s32.totalorder %s13, 0
    %p53 = por %p51, %p52
    %p54 = scmp.ne.s32.totalorder %s40, %s41
    %p55 = scmp.eq.s32.totalorder %s14, 1
    %p56 = por %p54, %p55
    %p58 = scmp.ne.s32.totalorder %s41, %s57
    %p59 = scmp.eq.s32.totalorder %s14, 0
    %p60 = por %p58, %p59
    %s61 = ssub.s32 %s16, %s30
    %s62 = ssub.s32 %s15, %s34
    %s63 = sor.u32 %s61, %s62
    %s64 = ssub.s32 %s17, %s26
    %s65 = sor.u32 %s63, %s64
    %p66 = scmp.eq.s32.totalorder %s65, 0
    %s68 = sadd.s32 %s67, 1
    %s69 = scalar_select %p66, %s67, %s68
    %p72 = pneg %p66
    %p73 = scmp.eq.s32.totalorder %s8, 1
    %p74 = por %p72, %p73
    %p75 = scmp.ne.s32.totalorder %s67, %s70
    %p76 = scmp.eq.s32.totalorder %s8, 0
    %p77 = por %p75, %p76
    %p78 = scmp.ne.s32.totalorder %s67, %s70
    %p79 = scmp.eq.s32.totalorder %s13, 1
    %p80 = por %p78, %p79
    %p81 = scmp.ne.s32.totalorder %s70, %s71
    %p82 = scmp.eq.s32.totalorder %s13, 0
    %p83 = por %p81, %p82
    %p84 = scmp.ne.s32.totalorder %s70, %s71
    %p85 = scmp.eq.s32.totalorder %s14, 1
    %p86 = por %p84, %p85
    %p88 = scmp.ne.s32.totalorder %s71, %s87
    %p89 = scmp.eq.s32.totalorder %s14, 0
    %p90 = por %p88, %p89
    %s91 = ssub.s32 %s16, %s30
    %s92 = ssub.s32 %s15, %s34
    %s93 = sor.u32 %s91, %s92
    %s94 = ssub.s32 %s17, %s26
    %s95 = sor.u32 %s93, %s94
    %p96 = scmp.eq.s32.totalorder %s95, 0
    %s98 = sadd.s32 %s97, 1
    %s99 = scalar_select %p96, %s97, %s98
    %p102 = pneg %p96
    %p103 = scmp.eq.s32.totalorder %s8, 1
    %p104 = por %p102, %p103
    %p105 = scmp.ne.s32.totalorder %s97, %s100
    %p106 = scmp.eq.s32.totalorder %s8, 0
    %p107 = por %p105, %p106
    %p108 = scmp.ne.s32.totalorder %s97, %s100
    %p109 = scmp.eq.s32.totalorder %s13, 1
    %p110 = por %p108, %p109
    %p111 = scmp.ne.s32.totalorder %s100, %s101
    %p112 = scmp.eq.s32.totalorder %s13, 0
    %p113 = por %p111, %p112
    %p114 = scmp.ne.s32.totalorder %s100, %s101
    %p115 = scmp.eq.s32.totalorder %s14, 1
    %p116 = por %p114, %p115
    %p118 = scmp.ne.s32.totalorder %s101, %s117
    %p119 = scmp.eq.s32.totalorder %s14, 0
    %p120 = por %p118, %p119
    %p121 = scmp.le.s32.totalorder 1, %s8
    %p122 = scmp.lt.s32.totalorder %s8, 3
    %p123 = pnand %p121, %p122
    %p124 = pneg %p123
    // Predicated region
    $region9: #{_lambda_.1} parent=5 // pred_check
      _
    $region10: #{_lambda_.1} parent=5 // pred_check_branch
      %126 = sbr.rel (%p123) target = $region12
    $region11: #{_lambda_.1} parent=5 // pred_region
      %s127 = ssub.s32 %s8, 1
      // Predicated region
      $region13: #{_lambda_.1} parent=11 // pred_check
        %p128 = pneg %p53
      $region14: #{_lambda_.1} parent=11 // pred_check_branch
        %130 = sbr.rel (%p128) target = $region16
      $region15: #{_lambda_.1} parent=11 // pred_region
        %p131 = scmp.lt.s32.totalorder %s18, 0
        %s132 = scalar_select %p131, %s18, 0
        %s133 = smul.addr %s132, 2
        %s134 = scalar_lea.vmem %s0, %s133
      $region16: #{_lambda_.1} parent=11 // pred_fallthru
        _
    $region12: #{_lambda_.1} parent=5 // pred_fallthru
      _
    %p135 = scmp.lt.s32.totalorder %s8, 2
    // Predicated region
    $region17: #{_lambda_.1} parent=5 // pred_check
      %p136 = pneg %p135
    $region18: #{_lambda_.1} parent=5 // pred_check_branch
      %138 = sbr.rel (%p136) target = $region20
    $region19: #{_lambda_.1} parent=5 // pred_region
      // Predicated region
      $region21: #{_lambda_.1} parent=19 // pred_check
        %p139 = pneg %p77
      $region22: #{_lambda_.1} parent=19 // pred_check_branch
        %141 = sbr.rel (%p139) target = $region24
      $region23: #{_lambda_.1} parent=19 // pred_region
        %s142 = smul.u32 32, %s17
        %p143 = scmp.lt.s32.totalorder %s16, 1
        %s144 = scalar_select %p143, %s16, 1
        %p145 = scmp.lt.s32.totalorder %s15, 0
        %s146 = scalar_select %p145, %s15, 0
        %p147 = scmp.lt.s32.totalorder %s142, 31
        %s148 = scalar_select %p147, %s142, 31
        %s149 = smul.addr %s146, 32
        %s150 = sadd.s32 %s148, %s149
        %s151 = smul.addr %s144, 32
        %s152 = sadd.s32 %s150, %s151
        %s153 = smul.addr %s152, 4
        %s154 = scalar_lea.vmem %s1, %s153
        %s155 = smul.u32 32, %s17
      $region24: #{_lambda_.1} parent=19 // pred_fallthru
        _
    $region20: #{_lambda_.1} parent=5 // pred_fallthru
      _
    %p156 = scmp.le.s32.totalorder 1, %s8
    %p157 = scmp.lt.s32.totalorder %s8, 3
    %p158 = pnand %p156, %p157
    %p159 = pneg %p158
    // Predicated region
    $region25: #{_lambda_.1} parent=5 // pred_check
      _
    $region26: #{_lambda_.1} parent=5 // pred_check_branch
      %161 = sbr.rel (%p158) target = $region28
    $region27: #{_lambda_.1} parent=5 // pred_region
      %s162 = ssub.s32 %s8, 1
      %p163 = scmp.lt.s32.totalorder %s18, 0
      %s164 = scalar_select %p163, %s18, 0
      %s165 = smul.addr %s164, 2
      %s166 = scalar_lea.vmem %s0, %s165
      %p167 = pneg %p53
      %p168 = pneg %p50
      %s169 = smul.u32 32, %s20
      %p170 = scmp.lt.s32.totalorder %s19, 1
      %s171 = scalar_select %p170, %s19, 1
      %p172 = scmp.lt.s32.totalorder %s18, 0
      %s173 = scalar_select %p172, %s18, 0
      %p174 = scmp.lt.s32.totalorder %s169, 31
      %s175 = scalar_select %p174, %s169, 31
      %s176 = smul.addr %s173, 32
      %s177 = sadd.s32 %s175, %s176
      %s178 = smul.addr %s171, 32
      %s179 = sadd.s32 %s177, %s178
      %s180 = smul.addr %s179, 4
      %s181 = scalar_lea.vmem %s1, %s180
      %p182 = pneg %p83
      %p183 = pneg %p80
      %p184 = pneg %p113
      %p185 = pneg %p110
      %s186 = smul.u32 2, %s20
      %p187 = scmp.lt.s32.totalorder %s19, 1
      %s188 = scalar_select %p187, %s19, 1
      %p189 = scmp.lt.s32.totalorder %s18, 0
      %s190 = scalar_select %p189, %s18, 0
      %p191 = scmp.lt.s32.totalorder %s186, 1
      %s192 = scalar_select %p191, %s186, 1
      %s193 = smul.addr %s190, 2
      %s194 = sadd.s32 %s192, %s193
      %s195 = smul.addr %s188, 2
      %s196 = sadd.s32 %s194, %s195
      %s197 = smul.addr %s196, 2
      %s198 = scalar_lea.vmem %s2, %s197
      %p199 = scmp.lt.s32.totalorder %s18, 0
      %s200 = scalar_select %p199, %s18, 0
      %s201 = smul.addr %s200, 2
      %s202 = scalar_lea.vmem %s0, %s201
      %s203 = smul.u32 32, %s20
      %p204 = scmp.lt.s32.totalorder %s19, 1
      %s205 = scalar_select %p204, %s19, 1
      %p206 = scmp.lt.s32.totalorder %s18, 0
      %s207 = scalar_select %p206, %s18, 0
      %p208 = scmp.lt.s32.totalorder %s203, 31
      %s209 = scalar_select %p208, %s203, 31
      %s210 = smul.addr %s207, 32
      %s211 = sadd.s32 %s209, %s210
      %s212 = smul.addr %s205, 32
      %s213 = sadd.s32 %s211, %s212
      %s214 = smul.addr %s213, 4
      %s215 = scalar_lea.vmem %s1, %s214
      %s216 = smul.u32 32, %s20
      %s217 = smul.u32 2, %s20
      %p218 = scmp.lt.s32.totalorder %s19, 1
      %s219 = scalar_select %p218, %s19, 1
      %p220 = scmp.lt.s32.totalorder %s18, 0
      %s221 = scalar_select %p220, %s18, 0
      %p222 = scmp.lt.s32.totalorder %s217, 1
      %s223 = scalar_select %p222, %s217, 1
      %s224 = smul.addr %s221, 2
      %s225 = sadd.s32 %s223, %s224
      %s226 = smul.addr %s219, 2
      %s227 = sadd.s32 %s225, %s226
      %s228 = smul.addr %s227, 2
      %s229 = scalar_lea.vmem %s2, %s228
      %s230 = smul.u32 2, %s20
      %v231 = vld [vmem:[%s202] sm:$0x3]
      %v232 = vld [vmem:[%s215] sm:$0xf]
      %v233 = vld [vmem:[%s215 + $0x4] sm:$0xf]
      %v234 = vld [vmem:[%s215 + $0x8] sm:$0xf]
      %v235 = vld [vmem:[%s215 + $0xc] sm:$0xf]
      %v236 = vld [vmem:[%s215 + $0x10] sm:$0xf]
      %v237 = vld [vmem:[%s215 + $0x14] sm:$0xf]
      %v238 = vld [vmem:[%s215 + $0x18] sm:$0xf]
      %v239 = vld [vmem:[%s215 + $0x1c] sm:$0xf]
      %v240 = vld [vmem:[%s215 + $0x20] sm:$0xf]
      %v241 = vld [vmem:[%s215 + $0x24] sm:$0xf]
      %v242 = vld [vmem:[%s215 + $0x28] sm:$0xf]
      %v243 = vld [vmem:[%s215 + $0x2c] sm:$0xf]
      %v244 = vld [vmem:[%s215 + $0x30] sm:$0xf]
      %v245 = vld [vmem:[%s215 + $0x34] sm:$0xf]
      %v246 = vld [vmem:[%s215 + $0x38] sm:$0xf]
      %v247 = vld [vmem:[%s215 + $0x3c] sm:$0xf]
      %v248 = vld [vmem:[%s215 + $0x40] sm:$0xf]
      %v249 = vld [vmem:[%s215 + $0x44] sm:$0xf]
      %v250 = vld [vmem:[%s215 + $0x48] sm:$0xf]
      %v251 = vld [vmem:[%s215 + $0x4c] sm:$0xf]
      %v252 = vld [vmem:[%s215 + $0x50] sm:$0xf]
      %v253 = vld [vmem:[%s215 + $0x54] sm:$0xf]
      %v254 = vld [vmem:[%s215 + $0x58] sm:$0xf]
      %v255 = vld [vmem:[%s215 + $0x5c] sm:$0xf]
      %v256 = vld [vmem:[%s215 + $0x60] sm:$0xf]
      %v257 = vld [vmem:[%s215 + $0x64] sm:$0xf]
      %v258 = vld [vmem:[%s215 + $0x68] sm:$0xf]
      %v259 = vld [vmem:[%s215 + $0x6c] sm:$0xf]
      %v260 = vld [vmem:[%s215 + $0x70] sm:$0xf]
      %v261 = vld [vmem:[%s215 + $0x74] sm:$0xf]
      %v262 = vld [vmem:[%s215 + $0x78] sm:$0xf]
      %v263 = vld [vmem:[%s215 + $0x7c] sm:$0xf]
      %v296 = vunpack.c.l.b16 %v232
      %v297 = vunpack.c.l.b16 %v233
      %v298 = vunpack.c.l.b16 %v234
      %v299 = vunpack.c.l.b16 %v235
      %v300 = vunpack.c.l.b16 %v236
      %v301 = vunpack.c.l.b16 %v237
      %v302 = vunpack.c.l.b16 %v238
      %v303 = vunpack.c.l.b16 %v239
      %v304 = vunpack.c.l.b16 %v240
      %v305 = vunpack.c.l.b16 %v241
      %v306 = vunpack.c.l.b16 %v242
      %v307 = vunpack.c.l.b16 %v243
      %v308 = vunpack.c.l.b16 %v244
      %v309 = vunpack.c.l.b16 %v245
      %v310 = vunpack.c.l.b16 %v246
      %v311 = vunpack.c.l.b16 %v247
      %v312 = vunpack.c.l.b16 %v248
      %v313 = vunpack.c.l.b16 %v249
      %v314 = vunpack.c.l.b16 %v250
      %v315 = vunpack.c.l.b16 %v251
      %v316 = vunpack.c.l.b16 %v252
      %v317 = vunpack.c.l.b16 %v253
      %v318 = vunpack.c.l.b16 %v254
      %v319 = vunpack.c.l.b16 %v255
      %v320 = vunpack.c.l.b16 %v256
      %v321 = vunpack.c.l.b16 %v257
      %v322 = vunpack.c.l.b16 %v258
      %v323 = vunpack.c.l.b16 %v259
      %v324 = vunpack.c.l.b16 %v260
      %v325 = vunpack.c.l.b16 %v261
      %v326 = vunpack.c.l.b16 %v262
      %v327 = vunpack.c.l.b16 %v263
      %v328 = vpack.c.b16 %v297, %v296
      %v329 = vpack.c.b16 %v299, %v298
      %v330 = vpack.c.b16 %v301, %v300
      %v331 = vpack.c.b16 %v303, %v302
      %v332 = vpack.c.b16 %v305, %v304
      %v333 = vpack.c.b16 %v307, %v306
      %v334 = vpack.c.b16 %v309, %v308
      %v335 = vpack.c.b16 %v311, %v310
      %v336 = vpack.c.b16 %v313, %v312
      %v337 = vpack.c.b16 %v315, %v314
      %v338 = vpack.c.b16 %v317, %v316
      %v339 = vpack.c.b16 %v319, %v318
      %v340 = vpack.c.b16 %v321, %v320
      %v341 = vpack.c.b16 %v323, %v322
      %v342 = vpack.c.b16 %v325, %v324
      %v343 = vpack.c.b16 %v327, %v326
      %vm344 = vcmask 293888
      %v346 = vsel %vm344, %v231, 0
      %v349 = vsel %vm344, %v328, 0
      %v352 = vsel %vm344, %v329, 0
      %v355 = vsel %vm344, %v330, 0
      %v358 = vsel %vm344, %v331, 0
      %v361 = vsel %vm344, %v332, 0
      %v364 = vsel %vm344, %v333, 0
      %v367 = vsel %vm344, %v334, 0
      %v370 = vsel %vm344, %v335, 0
      %v373 = vsel %vm344, %v336, 0
      %v376 = vsel %vm344, %v337, 0
      %v379 = vsel %vm344, %v338, 0
      %v382 = vsel %vm344, %v339, 0
      %v385 = vsel %vm344, %v340, 0
      %v388 = vsel %vm344, %v341, 0
      %v391 = vsel %vm344, %v342, 0
      %v394 = vsel %vm344, %v343, 0
      %396 = vmatpush.bf16.xpose.msra.mxu0 %v370
      %397 = vmatpush.bf16.xpose.msra.mxu0 %v367
      %398 = vmatpush.bf16.xpose.msra.mxu0 %v364
      %399 = vmatpush.bf16.xpose.msra.mxu0 %v361
      %400 = vmatpush.bf16.xpose.msra.mxu0 %v358
      %401 = vmatpush.bf16.xpose.msra.mxu0 %v355
      %402 = vmatpush.bf16.xpose.msra.mxu0 %v352
      %403 = vmatpush.bf16.xpose.msra.mxu0 %v349
      %404 = vmatmul.bf16.gmra.mxu0 %v346
      %v405 = vpop.f32.mrf.mxu0
      %v406 = vadd.f32 0.0, %v405
      %v407 = vpop.f32.mrf.mxu0
      %408 = vdwg.mxu0
      %409 = vmatpush.bf16.xpose.msra.mxu0 %v394
      %410 = vmatpush.bf16.xpose.msra.mxu0 %v391
      %411 = vmatpush.bf16.xpose.msra.mxu0 %v388
      %412 = vmatpush.bf16.xpose.msra.mxu0 %v385
      %413 = vmatpush.bf16.xpose.msra.mxu0 %v382
      %414 = vmatpush.bf16.xpose.msra.mxu0 %v379
      %415 = vmatpush.bf16.xpose.msra.mxu0 %v376
      %416 = vmatpush.bf16.xpose.msra.mxu0 %v373
      %417 = vmatmul.bf16.gmra.mxu0 %v346
      %v418 = vpop.f32.mrf.mxu0
      %v419 = vadd.f32 0.0, %v418
      %v420 = vpop.f32.mrf.mxu0
      %421 = vdwg.mxu0
      %v422 = vpack.c.bf16 %v419, %v406
      %v424 = vrot.slane %v422, 2
      %vm425 = vcmask 1041408
      %v428 = vsel %vm425, %v422, %v424
      %430 = vst [vmem:[%s229] sm:$0xf] %v428
      %s431 = smul.u32 2, %s20
      %p432 = scmp.lt.s32.totalorder %s19, 1
      %s433 = scalar_select %p432, %s19, 1
      %p434 = scmp.lt.s32.totalorder %s18, 0
      %s435 = scalar_select %p434, %s18, 0
      %p436 = scmp.lt.s32.totalorder %s431, 1
      %s437 = scalar_select %p436, %s431, 1
      %s438 = smul.addr %s435, 2
      %s439 = sadd.s32 %s437, %s438
      %s440 = smul.addr %s433, 2
      %s441 = sadd.s32 %s439, %s440
      %s442 = smul.addr %s441, 2
      %s443 = scalar_lea.vmem %s2, %s442
      // Predicated region
      $region29: #{_lambda_.1} parent=27 // pred_check
        %p444 = pneg %p110
      $region30: #{_lambda_.1} parent=27 // pred_check_branch
        %446 = sbr.rel (%p444) target = $region32
      $region31: #{_lambda_.1} parent=27 // pred_region
        %s447 = smul.u32 2, %s20
      $region32: #{_lambda_.1} parent=27 // pred_fallthru
        _
    $region28: #{_lambda_.1} parent=5 // pred_fallthru
      _
    %p448 = scmp.le.s32.totalorder 2, %s8
    // Predicated region
    $region33: #{_lambda_.1} parent=5 // pred_check
      %p449 = pneg %p448
    $region34: #{_lambda_.1} parent=5 // pred_check_branch
      %451 = sbr.rel (%p449) target = $region36
    $region35: #{_lambda_.1} parent=5 // pred_region
      %s452 = ssub.s32 %s8, 2
      // Predicated region
      $region37: #{_lambda_.1} parent=35 // pred_check
        %p453 = pneg %p116
      $region38: #{_lambda_.1} parent=35 // pred_check_branch
        %455 = sbr.rel (%p453) target = $region40
      $region39: #{_lambda_.1} parent=35 // pred_region
        %s456 = smul.u32 2, %s23
        %p457 = scmp.lt.s32.totalorder %s22, 1
        %s458 = scalar_select %p457, %s22, 1
        %p459 = scmp.lt.s32.totalorder %s21, 0
        %s460 = scalar_select %p459, %s21, 0
        %p461 = scmp.lt.s32.totalorder %s456, 1
        %s462 = scalar_select %p461, %s456, 1
        %s463 = smul.addr %s460, 2
        %s464 = sadd.s32 %s462, %s463
        %s465 = smul.addr %s458, 2
        %s466 = sadd.s32 %s464, %s465
        %s467 = smul.addr %s466, 2
        %s468 = scalar_lea.vmem %s2, %s467
      $region40: #{_lambda_.1} parent=35 // pred_fallthru
        _
    $region36: #{_lambda_.1} parent=5 // pred_fallthru
      _
  $region6: #{_lambda_.1} parent=0 // loop_footer
    %s12 = sadd.s32 1, %s8
  $region7: #{_lambda_.1} parent=0 // loop_footer_branch
    %7 = sbr.rel target = $region3
  $region8: #{_lambda_.1} parent=0 // loop_exit
    _

</llo_original>
